<compile_context>
chip_gen: v6e
topology: v6e:2x2x1
jax: 0.10.0
libtpu: 0.0.40
codegen_flags: <defaults>
</compile_context>

<pallas_src>
import functools

import jax
import jax.numpy as jnp
from jax.experimental import pallas as pl
from jax.experimental.pallas import tpu as pltpu


_VMEM_LIMIT_BYTES = 48 * 1024 * 1024  # raised scoped-VMEM cap; < 64 MiB (v7x physical)


def _round_up(x, m):
    return (x + m - 1) // m * m


# ----------------------------------------------------------------------------
# Kernel 1: feature transform   XWc = h @ Wc ,  XWcb = h @ Wcb   (one pass over h)
# ----------------------------------------------------------------------------
def _feature_transform_kernel(h_ref, wc_ref, wcb_ref, xwc_ref, xwcb_ref):
    hf = h_ref[...].astype(jnp.float32)
    xwc_ref[...] = jnp.dot(hf, wc_ref[...],
                           preferred_element_type=jnp.float32).astype(xwc_ref.dtype)
    xwcb_ref[...] = jnp.dot(hf, wcb_ref[...],
                            preferred_element_type=jnp.float32).astype(xwcb_ref.dtype)


def feature_transform(h, wc, wcb, *, tm=256):
    N, Din = h.shape
    H = wc.shape[1]
    assert N % tm == 0, "rows must be padded to a multiple of tm"
    return pl.pallas_call(
        _feature_transform_kernel,
        out_shape=(jax.ShapeDtypeStruct((N, H), jnp.float32),
                   jax.ShapeDtypeStruct((N, H), jnp.float32)),
        grid_spec=pltpu.PrefetchScalarGridSpec(
            num_scalar_prefetch=0,
            grid=(N // tm,),
            in_specs=[
                pl.BlockSpec((tm, Din), lambda i: (i, 0)),   # h row tile
                pl.BlockSpec((Din, H), lambda i: (0, 0)),    # Wc   (VMEM resident)
                pl.BlockSpec((Din, H), lambda i: (0, 0)),    # Wcb  (VMEM resident)
            ],
            out_specs=[
                pl.BlockSpec((tm, H), lambda i: (i, 0)),
                pl.BlockSpec((tm, H), lambda i: (i, 0)),
            ],
        ),
        compiler_params=pltpu.CompilerParams(
            dimension_semantics=("parallel",),
            vmem_limit_bytes=_VMEM_LIMIT_BYTES),
    )(h, wc, wcb)


# ----------------------------------------------------------------------------
# Kernel 2: fused aggregation + concat + fc + residual mix
#   out[i] = (1-a) * ( (A_c @ XWc)[i] @ Wfc_top + (A_cb @ XWcb)[i] @ Wfc_bot + b_eff )
#            + a * h[i]
# ----------------------------------------------------------------------------
def _dirgcn_agg_kernel(alpha, ac_ref, acb_ref, xwc_ref, xwcb_ref, h_ref,
                       wtop_ref, wbot_ref, beff_ref, o_ref,
                       accc_ref, acccb_ref):
    k = pl.program_id(1)

    @pl.when(k == 0)
    def _init():
        accc_ref[...] = jnp.zeros_like(accc_ref)
        acccb_ref[...] = jnp.zeros_like(acccb_ref)

    # bf16 adjacency tiles (dominant HBM stream, halved vs f32) -> f32 in VMEM.
    ac = ac_ref[...].astype(jnp.float32)
    acb = acb_ref[...].astype(jnp.float32)
    accc_ref[...] += jnp.dot(ac, xwc_ref[...], preferred_element_type=jnp.float32)
    acccb_ref[...] += jnp.dot(acb, xwcb_ref[...], preferred_element_type=jnp.float32)

    @pl.when(k == pl.num_programs(1) - 1)
    def _finalize():
        # concat([c, cb]) @ W_fc  ==  c @ W_fc[:H] + cb @ W_fc[H:]   (exact identity)
        fc = (jnp.dot(accc_ref[...], wtop_ref[...], preferred_element_type=jnp.float32)
              + jnp.dot(acccb_ref[...], wbot_ref[...], preferred_element_type=jnp.float32)
              + beff_ref[...])
        o_ref[...] = ((1.0 - alpha) * fc + alpha * h_ref[...]).astype(o_ref.dtype)


def dirgcn_aggregate(adj_cites, adj_cited_by, xwc, xwcb, h, wtop, wbot, beff,
                     *, alpha, tm=256, tk=512):
    N, Din = h.shape
    H = xwc.shape[1]
    assert N % tm == 0 and N % tk == 0, "rows must be padded to tile multiples"
    kernel = functools.partial(_dirgcn_agg_kernel, float(alpha))
    return pl.pallas_call(
        kernel,
        out_shape=jax.ShapeDtypeStruct((N, Din), jnp.float32),
        grid_spec=pltpu.PrefetchScalarGridSpec(
            num_scalar_prefetch=0,
            grid=(N // tm, N // tk),                          # reduction axis last
            in_specs=[
                pl.BlockSpec((tm, tk), lambda i, k: (i, k)),  # A_cites tile (bf16)
                pl.BlockSpec((tm, tk), lambda i, k: (i, k)),  # A_cited_by tile (bf16)
                pl.BlockSpec((tk, H), lambda i, k: (k, 0)),   # XWc tile
                pl.BlockSpec((tk, H), lambda i, k: (k, 0)),   # XWcb tile
                pl.BlockSpec((tm, Din), lambda i, k: (i, 0)),  # residual h row tile
                pl.BlockSpec((H, Din), lambda i, k: (0, 0)),   # W_fc top half (resident)
                pl.BlockSpec((H, Din), lambda i, k: (0, 0)),   # W_fc bottom half (resident)
                pl.BlockSpec((1, Din), lambda i, k: (0, 0)),   # folded bias (resident)
            ],
            out_specs=pl.BlockSpec((tm, Din), lambda i, k: (i, 0)),
            scratch_shapes=[pltpu.VMEM((tm, H), jnp.float32),
                            pltpu.VMEM((tm, H), jnp.float32)],
        ),
        compiler_params=pltpu.CompilerParams(
            dimension_semantics=("parallel", "arbitrary"),
            vmem_limit_bytes=_VMEM_LIMIT_BYTES),
    )(adj_cites, adj_cited_by, xwc, xwcb, h, wtop, wbot, beff.reshape(1, Din))


# ----------------------------------------------------------------------------
# Graph normalization (dense stand-in for dglnn.GraphConv's internal norm)
#   A[dst, src] = edge weight for edge src -> dst (aggregation matrix)
# ----------------------------------------------------------------------------
def normalize_dir_adjacency(a_cites, a_cited_by):
    a_cites = a_cites.astype(jnp.float32)
    a_cited_by = a_cited_by.astype(jnp.float32)
    # norm='right': divide the aggregated sum by the destination in-degree (row sum).
    deg_in = jnp.clip(a_cites.sum(axis=1, keepdims=True), 1.0, None)
    a_cites_n = a_cites / deg_in
    # norm='left': divide each message by the sender out-degree (column sum).
    deg_out = jnp.clip(a_cited_by.sum(axis=0, keepdims=True), 1.0, None)
    a_cited_by_n = a_cited_by / deg_out
    return a_cites_n, a_cited_by_n


# ----------------------------------------------------------------------------
# Module wrapper
# ----------------------------------------------------------------------------
class DirGCNPallas:
    def __init__(self, in_dim, hidden_dim, graph, alpha, *, key=None, tm=256, tk=512):
        assert tk % tm == 0
        self.in_dim = in_dim
        self.hidden_dim = hidden_dim
        self.alpha = float(alpha)
        self.tm, self.tk = tm, tk

        # TODO(synk): DGL stores the graphs sparsely; here they are densified and
        # degree-normalized once at construction (deterministic preprocessing).
        a_cites_n, a_cited_by_n = normalize_dir_adjacency(graph["cites"],
                                                          graph["cited_by"])
        N = a_cites_n.shape[0]
        self.n_nodes = N
        self.n_pad = _round_up(N, tk)
        if self.n_pad != N:
            pad = self.n_pad - N
            a_cites_n = jnp.pad(a_cites_n, ((0, pad), (0, pad)))
            a_cited_by_n = jnp.pad(a_cited_by_n, ((0, pad), (0, pad)))
        # Store adjacencies in bf16: halves the dominant HBM stream of the kernel.
        self.adj_cites = a_cites_n.astype(jnp.bfloat16)
        self.adj_cited_by = a_cited_by_n.astype(jnp.bfloat16)

        key = key if key is not None else jax.random.PRNGKey(42)
        k1, k2, k3, k4, k5, k6 = jax.random.split(key, 6)
        s = 0.05
        self.w_cites = jax.random.normal(k1, (in_dim, hidden_dim), jnp.float32) * s
        self.b_cites = jax.random.normal(k2, (hidden_dim,), jnp.float32) * s
        self.w_cited_by = jax.random.normal(k3, (in_dim, hidden_dim), jnp.float32) * s
        self.b_cited_by = jax.random.normal(k4, (hidden_dim,), jnp.float32) * s
        self.w_fc = jax.random.normal(k5, (2 * hidden_dim, in_dim), jnp.float32) * s
        self.b_fc = jax.random.normal(k6, (in_dim,), jnp.float32) * s

    def __call__(self, h):
        N, Din = h.shape
        assert Din == self.in_dim
        H = self.hidden_dim
        h_pad = jnp.pad(h, ((0, self.n_pad - N), (0, 0))) if self.n_pad != N else h

        # 1) feature transform (both convs share the read of h)
        xwc, xwcb = feature_transform(h_pad, self.w_cites, self.w_cited_by, tm=self.tm)

        # 2) fold the per-conv biases through the fc layer (exact):
        #    (c + b_c) @ Wtop + (cb + b_cb) @ Wbot + b_fc
        #    = c @ Wtop + cb @ Wbot + (b_fc + b_c @ Wtop + b_cb @ Wbot)
        wtop = self.w_fc[:H]
        wbot = self.w_fc[H:]
        beff = self.b_fc + self.b_cites @ wtop + self.b_cited_by @ wbot

        out = dirgcn_aggregate(self.adj_cites, self.adj_cited_by, xwc, xwcb, h_pad,
                               wtop, wbot, beff, alpha=self.alpha,
                               tm=self.tm, tk=self.tk)
        return out[:N]


# ----------------------------------------------------------------------------
# Demo / correctness check
# ----------------------------------------------------------------------------
def _reference(model, h):
    """Pure-jnp forward following the torch module step by step."""
    N = h.shape[0]
    a_c = model.adj_cites[:N, :N].astype(jnp.float32)
    a_cb = model.adj_cited_by[:N, :N].astype(jnp.float32)
    cites_msg = a_c @ (h @ model.w_cites) + model.b_cites
    cited_by_msg = a_cb @ (h @ model.w_cited_by) + model.b_cited_by
    hidden = jnp.concatenate([cites_msg, cited_by_msg], axis=1)
    fc = hidden @ model.w_fc + model.b_fc
    return (1.0 - model.alpha) * fc + model.alpha * h


if __name__ == "__main__":
    n_nodes, in_dim, hidden_dim, alpha = 1024, 256, 128, 0.15

    key = jax.random.PRNGKey(0)
    k_h, k_g, k_p = jax.random.split(key, 3)

    # Random directed citation graph: C[i, j] = 1  <=>  paper i cites paper j.
    C = (jax.random.uniform(k_g, (n_nodes, n_nodes)) < 0.02).astype(jnp.float32)
    C = C * (1.0 - jnp.eye(n_nodes, dtype=jnp.float32))
    graph = {
        "cites": C.T,        # aggregation matrix A[dst, src] for edges src -> dst
        "cited_by": C,       # reverse-direction graph
    }

    h = jax.random.normal(k_h, (n_nodes, in_dim), jnp.float32)

    model = DirGCNPallas(in_dim, hidden_dim, graph, alpha, key=k_p)

    out = model(h)
    out = jax.block_until_ready(out)
    assert out.shape == (n_nodes, in_dim)

    # Strict check: kernel vs. jnp reference on the exact same (bf16-stored) graph.
    ref = _reference(model, h)
    assert jnp.allclose(out, ref, atol=2e-3, rtol=2e-3), (
        float(jnp.max(jnp.abs(out - ref))))

    # bf16-adjacency accuracy check vs. a fully-f32 graph pipeline (generous abs tol).
    a_c32, a_cb32 = normalize_dir_adjacency(graph["cites"], graph["cited_by"])
    cites32 = a_c32 @ (h @ model.w_cites) + model.b_cites
    cited32 = a_cb32 @ (h @ model.w_cited_by) + model.b_cited_by
    ref32 = ((1.0 - alpha) * (jnp.concatenate([cites32, cited32], axis=1) @ model.w_fc
                              + model.b_fc) + alpha * h)
    assert jnp.allclose(out, ref32, atol=5e-2, rtol=0.0), (
        float(jnp.max(jnp.abs(out - ref32))))

    print("KERNEL_OK")
</pallas_src>

<mosaic_0001>
module attributes {stable_mosaic.version = 11 : i64} {
  func.func @_feature_transform_kernel(%arg0: i32, %arg1: memref<256x256xf32, #tpu.memory_space<vmem>>, %arg2: memref<256x128xf32, #tpu.memory_space<vmem>>, %arg3: memref<256x128xf32, #tpu.memory_space<vmem>>, %arg4: memref<256x128xf32, #tpu.memory_space<vmem>>, %arg5: memref<256x128xf32, #tpu.memory_space<vmem>>) attributes {dimension_semantics = [#tpu.dimension_semantics<parallel>], iteration_bounds = array<i64: 4>, scalar_prefetch = 0 : i64, scratch_operands = 0 : i64, tpu.core_type = #tpu.core_type<tc>, window_params = [{transform_indices = @transform_0, window_bounds = array<i64: 256, 256>}, {pipeline_mode = #tpu.pipeline_mode<synchronous>, transform_indices = @transform_1, window_bounds = array<i64: 256, 128>}, {pipeline_mode = #tpu.pipeline_mode<synchronous>, transform_indices = @transform_2, window_bounds = array<i64: 256, 128>}, {transform_indices = @transform_3, window_bounds = array<i64: 256, 128>}, {transform_indices = @transform_4, window_bounds = array<i64: 256, 128>}]} {
    %c0 = arith.constant 0 : index
    %c0_0 = arith.constant 0 : index
    %0 = vector.load %arg1[%c0, %c0_0] : memref<256x256xf32, #tpu.memory_space<vmem>>, vector<256x256xf32>
    %c0_1 = arith.constant 0 : index
    %c0_2 = arith.constant 0 : index
    %1 = vector.load %arg2[%c0_1, %c0_2] : memref<256x128xf32, #tpu.memory_space<vmem>>, vector<256x128xf32>
    %cst = arith.constant dense<0.000000e+00> : vector<256x128xf32>
    %2 = tpu.matmul %0, %1, %cst {dimension_numbers = #tpu.dot_dimension_numbers<[1], [0], [0], [1], [0, 0, 1, 1], [], []>} : vector<256x256xf32>, vector<256x128xf32>, vector<256x128xf32> -> vector<256x128xf32>
    %c0_3 = arith.constant 0 : index
    %c0_4 = arith.constant 0 : index
    %3 = vector.load %arg4[%c0_3, %c0_4] : memref<256x128xf32, #tpu.memory_space<vmem>>, vector<256x128xf32>
    tpu.vector_store %arg4[%c0_3, %c0_4], %2 {strides = array<i32>} : memref<256x128xf32, #tpu.memory_space<vmem>>, vector<256x128xf32>,
    %c0_5 = arith.constant 0 : index
    %c0_6 = arith.constant 0 : index
    %4 = vector.load %arg3[%c0_5, %c0_6] : memref<256x128xf32, #tpu.memory_space<vmem>>, vector<256x128xf32>
    %cst_7 = arith.constant dense<0.000000e+00> : vector<256x128xf32>
    %5 = tpu.matmul %0, %4, %cst_7 {dimension_numbers = #tpu.dot_dimension_numbers<[1], [0], [0], [1], [0, 0, 1, 1], [], []>} : vector<256x256xf32>, vector<256x128xf32>, vector<256x128xf32> -> vector<256x128xf32>
    %c0_8 = arith.constant 0 : index
    %c0_9 = arith.constant 0 : index
    %6 = vector.load %arg5[%c0_8, %c0_9] : memref<256x128xf32, #tpu.memory_space<vmem>>, vector<256x128xf32>
    tpu.vector_store %arg5[%c0_8, %c0_9], %5 {strides = array<i32>} : memref<256x128xf32, #tpu.memory_space<vmem>>, vector<256x128xf32>,
    return
  }
  func.func @transform_0(%arg0: i32) -> (i32, i32) {
    %c0_i32 = arith.constant 0 : i32
    %c0_i32_0 = arith.constant 0 : i32
    return %arg0, %c0_i32 : i32, i32
  }
  func.func @transform_1(%arg0: i32) -> (i32, i32) {
    %c0_i32 = arith.constant 0 : i32
    %c0_i32_0 = arith.constant 0 : i32
    %c0_i32_1 = arith.constant 0 : i32
    return %c0_i32, %c0_i32_0 : i32, i32
  }
  func.func @transform_2(%arg0: i32) -> (i32, i32) {
    %c0_i32 = arith.constant 0 : i32
    %c0_i32_0 = arith.constant 0 : i32
    %c0_i32_1 = arith.constant 0 : i32
    return %c0_i32, %c0_i32_0 : i32, i32
  }
  func.func @transform_3(%arg0: i32) -> (i32, i32) {
    %c0_i32 = arith.constant 0 : i32
    %c0_i32_0 = arith.constant 0 : i32
    return %arg0, %c0_i32 : i32, i32
  }
  func.func @transform_4(%arg0: i32) -> (i32, i32) {
    %c0_i32 = arith.constant 0 : i32
    %c0_i32_0 = arith.constant 0 : i32
    return %arg0, %c0_i32 : i32, i32
  }
}

</mosaic_0001>

<llo_original>
// kernel: tpu_custom_call.1
$region0: #{tpu_custom_call.1}
  #allocation0 [shape = 'u32[]', space=smem, size = 0x4, offset = 0x4, fixed_abs, tag = 'smem constant byte address 0x4 - core index']
  #allocation1 [shape = 'u32[144,128]{1,0:T(1,128)}', space=vmem, size = 0x12000, scoped, tag = 'internal scratch']
  %s0 = inlined_call_operand.hbm [shape: f32[1024,256], index: 0, kind: input, shape index: {}]
  %s1 = inlined_call_operand.hbm [shape: f32[256,128], index: 1, kind: input, shape index: {}]
  %s2 = inlined_call_operand.hbm [shape: f32[256,128], index: 2, kind: input, shape index: {}]
  %s3 = inlined_call_operand.hbm [shape: f32[1024,128], index: 3, kind: output, shape index: {0}]
  %s4 = inlined_call_operand.hbm [shape: f32[1024,128], index: 4, kind: output, shape index: {1}]
  %5 = xla_tuple %s3, %s4
  %s6 = sld [smem:[#allocation0]]
  $region65: #{tpu_custom_call.1} parent=0
    _
  %s8 = ssub.s32 1, %s6
  %s9 = scalar_select 0, %s8, %s6
  $region1: #{tpu_custom_call.1} parent=0
    #allocation2 [shape = 'u8[524288]{0}', space=vmem, size = 0x80000, scoped, tag = 'input window, operand 0']
    #allocation3 [shape = 's32[2]{0}', space=sflag, size = 0x8, scoped, tag = 'scoped memory for tpu_custom_call.1']
    #allocation4 [shape = 's32[2]{0}', space=sflag, size = 0x8, scoped, tag = 'scoped memory for tpu_custom_call.1']
    #allocation5 [shape = 'u8[131072]{0}', space=vmem, size = 0x20000, scoped, tag = 'input window, operand 1, single buffered']
    #allocation6 [shape = 's32[1]{0}', space=sflag, size = 0x4, scoped, tag = 'scoped memory for tpu_custom_call.1']
    #allocation7 [shape = 'u8[131072]{0}', space=vmem, size = 0x20000, scoped, tag = 'input window, operand 2, single buffered']
    #allocation8 [shape = 'u8[262144]{0}', space=vmem, size = 0x40000, scoped, tag = 'output window, operand 0']
    #allocation9 [shape = 'u8[262144]{0}', space=vmem, size = 0x40000, scoped, tag = 'output window, operand 1']
    #allocation10 [shape = 's32[2]{0}', space=sflag, size = 0x8, scoped, tag = 'scoped memory for tpu_custom_call.1']
    %10 = vsyncpa [#allocation3], 0
    %s11 = scalar_lea.sflag [#allocation3], 1
    %12 = vsyncpa %s11, 0
    %13 = vsyncpa [#allocation6], 0
    %14 = vsyncpa [#allocation4], 0
    %s15 = scalar_lea.sflag [#allocation4], 1
    %16 = vsyncpa %s15, 0
    %17 = vsyncpa [#allocation10], 0
    %s18 = scalar_lea.sflag [#allocation10], 1
    %19 = vsyncpa %s18, 0
    loop: start=0, step=1, limit=6
    $region2: #{tpu_custom_call.1} parent=1 // loop_pre_header
      _
    $region3: #{tpu_custom_call.1} parent=1 // loop_header
      %s21 = sphi 0, %s25
      %p22 = scmp.ge.s32.totalorder %s21, 6
      %s31 = sphi 0, %s33
      %s34 = sphi 0, %s31
      %s35 = sphi 0, %s34
      %s51 = sphi 0, %s35
      %s55 = sphi 0, %s55
      %s57 = sphi 0, %s55
      %s58 = sphi 0, %s57
      %s72 = sphi 0, %s58
      %s76 = sphi 0, %s76
      %s78 = sphi 0, %s76
      %s79 = sphi 0, %s78
      %s93 = sphi 0, %s79
      %s99 = sphi 0, %s101
      %s102 = sphi 0, %s99
      %s103 = sphi 0, %s102
      %s119 = sphi 0, %s103
      %s125 = sphi 0, %s127
      %s128 = sphi 0, %s125
      %s129 = sphi 0, %s128
      %s145 = sphi 0, %s129
    $region4: #{tpu_custom_call.1} parent=1 // loop_header_branch
      %24 = sbr.rel (%p22) target = $region8
    $region5: #{tpu_custom_call.1} parent=1 // loop_body
      %s26 = ssub.s32 %s21, 1
      %s27 = ssub.s32 %s21, 2
      %s28 = sadd.s32 %s21, 1
      %s29 = ssub.s32 %s21, %s28
      %p30 = scmp.eq.s32.totalorder %s29, 0
      %s32 = sadd.s32 %s31, 1
      %s33 = scalar_select %p30, %s31, %s32
      %p36 = pneg %p30
      %p37 = scmp.eq.s32.totalorder %s21, 3
      %p38 = por %p36, %p37
      %p39 = scmp.ne.s32.totalorder %s31, %s34
      %p40 = scmp.eq.s32.totalorder %s21, 0
      %p41 = por %p39, %p40
      %p42 = scmp.ne.s32.totalorder %s31, %s34
      %p43 = scmp.eq.s32.totalorder %s26, 3
      %p44 = por %p42, %p43
      %p45 = scmp.ne.s32.totalorder %s34, %s35
      %p46 = scmp.eq.s32.totalorder %s26, 0
      %p47 = por %p45, %p46
      %p48 = scmp.ne.s32.totalorder %s34, %s35
      %p49 = scmp.eq.s32.totalorder %s27, 3
      %p50 = por %p48, %p49
      %p52 = scmp.ne.s32.totalorder %s35, %s51
      %p53 = scmp.eq.s32.totalorder %s27, 0
      %p54 = por %p52, %p53
      %s56 = sadd.s32 %s55, 1
      %p59 = scmp.eq.s32.totalorder %s21, 3
      %p60 = scmp.ne.s32.totalorder %s55, %s57
      %p61 = scmp.eq.s32.totalorder %s21, 0
      %p62 = por %p60, %p61
      %p63 = scmp.ne.s32.totalorder %s55, %s57
      %p64 = scmp.eq.s32.totalorder %s26, 3
      %p65 = por %p63, %p64
      %p66 = scmp.ne.s32.totalorder %s57, %s58
      %p67 = scmp.eq.s32.totalorder %s26, 0
      %p68 = por %p66, %p67
      %p69 = scmp.ne.s32.totalorder %s57, %s58
      %p70 = scmp.eq.s32.totalorder %s27, 3
      %p71 = por %p69, %p70
      %p73 = scmp.ne.s32.totalorder %s58, %s72
      %p74 = scmp.eq.s32.totalorder %s27, 0
      %p75 = por %p73, %p74
      %s77 = sadd.s32 %s76, 1
      %p80 = scmp.eq.s32.totalorder %s21, 3
      %p81 = scmp.ne.s32.totalorder %s76, %s78
      %p82 = scmp.eq.s32.totalorder %s21, 0
      %p83 = por %p81, %p82
      %p84 = scmp.ne.s32.totalorder %s76, %s78
      %p85 = scmp.eq.s32.totalorder %s26, 3
      %p86 = por %p84, %p85
      %p87 = scmp.ne.s32.totalorder %s78, %s79
      %p88 = scmp.eq.s32.totalorder %s26, 0
      %p89 = por %p87, %p88
      %p90 = scmp.ne.s32.totalorder %s78, %s79
      %p91 = scmp.eq.s32.totalorder %s27, 3
      %p92 = por %p90, %p91
      %p94 = scmp.ne.s32.totalorder %s79, %s93
      %p95 = scmp.eq.s32.totalorder %s27, 0
      %p96 = por %p94, %p95
      %s97 = ssub.s32 %s21, %s28
      %p98 = scmp.eq.s32.totalorder %s97, 0
      %s100 = sadd.s32 %s99, 1
      %s101 = scalar_select %p98, %s99, %s100
      %p104 = pneg %p98
      %p105 = scmp.eq.s32.totalorder %s21, 3
      %p106 = por %p104, %p105
      %p107 = scmp.ne.s32.totalorder %s99, %s102
      %p108 = scmp.eq.s32.totalorder %s21, 0
      %p109 = por %p107, %p108
      %p110 = scmp.ne.s32.totalorder %s99, %s102
      %p111 = scmp.eq.s32.totalorder %s26, 3
      %p112 = por %p110, %p111
      %p113 = scmp.ne.s32.totalorder %s102, %s103
      %p114 = scmp.eq.s32.totalorder %s26, 0
      %p115 = por %p113, %p114
      %p116 = scmp.ne.s32.totalorder %s102, %s103
      %p117 = scmp.eq.s32.totalorder %s27, 3
      %p118 = por %p116, %p117
      %p120 = scmp.ne.s32.totalorder %s103, %s119
      %p121 = scmp.eq.s32.totalorder %s27, 0
      %p122 = por %p120, %p121
      %s123 = ssub.s32 %s21, %s28
      %p124 = scmp.eq.s32.totalorder %s123, 0
      %s126 = sadd.s32 %s125, 1
      %s127 = scalar_select %p124, %s125, %s126
      %p130 = pneg %p124
      %p131 = scmp.eq.s32.totalorder %s21, 3
      %p132 = por %p130, %p131
      %p133 = scmp.ne.s32.totalorder %s125, %s128
      %p134 = scmp.eq.s32.totalorder %s21, 0
      %p135 = por %p133, %p134
      %p136 = scmp.ne.s32.totalorder %s125, %s128
      %p137 = scmp.eq.s32.totalorder %s26, 3
      %p138 = por %p136, %p137
      %p139 = scmp.ne.s32.totalorder %s128, %s129
      %p140 = scmp.eq.s32.totalorder %s26, 0
      %p141 = por %p139, %p140
      %p142 = scmp.ne.s32.totalorder %s128, %s129
      %p143 = scmp.eq.s32.totalorder %s27, 3
      %p144 = por %p142, %p143
      %p146 = scmp.ne.s32.totalorder %s129, %s145
      %p147 = scmp.eq.s32.totalorder %s27, 0
      %p148 = por %p146, %p147
      %p149 = scmp.le.s32.totalorder 1, %s21
      %p150 = scmp.lt.s32.totalorder %s21, 5
      %p151 = pnand %p149, %p150
      %p152 = pneg %p151
      // Predicated region
      $region9: #{tpu_custom_call.1} parent=5 // pred_check
        _
      $region10: #{tpu_custom_call.1} parent=5 // pred_check_branch
        %154 = sbr.rel (%p151) target = $region12
      $region11: #{tpu_custom_call.1} parent=5 // pred_region
        %s155 = ssub.s32 %s21, 1
        // Predicated region
        $region13: #{tpu_custom_call.1} parent=11 // pred_check
          %p156 = pneg %p68
        $region14: #{tpu_custom_call.1} parent=11 // pred_check_branch
          %158 = sbr.rel (%p156) target = $region16
        $region15: #{tpu_custom_call.1} parent=11 // pred_region
          %s160 = ssub.s32 4096, 4096
          %161 = vsyncadd [#allocation6], %s160
          %s162 = sshll.u32 [#allocation5], 4
          %s163 = int_to_ptr.vmem [resolvable:$true] %s162
          %168 = dma.hbm_to_vmem [thread:$0]  %s1, 4096, %s163, [#allocation6], 128, 128, 8
        $region16: #{tpu_custom_call.1} parent=11 // pred_fallthru
          _
        // Predicated region
        $region17: #{tpu_custom_call.1} parent=11 // pred_check
          %p169 = pneg %p89
        $region18: #{tpu_custom_call.1} parent=11 // pred_check_branch
          %171 = sbr.rel (%p169) target = $region20
        $region19: #{tpu_custom_call.1} parent=11 // pred_region
          %s173 = ssub.s32 4096, 4096
          %174 = vsyncadd [#allocation6], %s173
          %s175 = sshll.u32 [#allocation7], 4
          %s176 = int_to_ptr.vmem [resolvable:$true] %s175
          %181 = dma.hbm_to_vmem [thread:$0]  %s2, 4096, %s176, [#allocation6], 128, 128, 8
        $region20: #{tpu_custom_call.1} parent=11 // pred_fallthru
          _
      $region12: #{tpu_custom_call.1} parent=5 // pred_fallthru
        _
      %p182 = scmp.lt.s32.totalorder %s21, 4
      // Predicated region
      $region21: #{tpu_custom_call.1} parent=5 // pred_check
        %p183 = pneg %p182
      $region22: #{tpu_custom_call.1} parent=5 // pred_check_branch
        %185 = sbr.rel (%p183) target = $region24
      $region23: #{tpu_custom_call.1} parent=5 // pred_region
        // Predicated region
        $region25: #{tpu_custom_call.1} parent=23 // pred_check
          %p186 = pneg %p41
        $region26: #{tpu_custom_call.1} parent=23 // pred_check_branch
          %188 = sbr.rel (%p186) target = $region28
        $region27: #{tpu_custom_call.1} parent=23 // pred_region
          %s189 = sand.u32 %s31, 1
          %s190 = scalar_lea.sflag [#allocation3], %s189
          %s191 = sand.u32 %s31, 1
          %s192 = smul.addr %s191, 512
          %s193 = scalar_lea.vmem [#allocation2], %s192
          %s194 = smul.u32 32, %s21
          %s196 = ssub.s32 8192, 8192
          %197 = vsyncadd %s190, %s196
          %s198 = smul.addr %s194, 2
          %s199 = smul.addr %s198, 128
          %s200 = scalar_lea.hbm %s0, %s199
          %s201 = sshll.u32 %s193, 4
          %s202 = int_to_ptr.vmem [resolvable:$true] %s201
          %207 = dma.hbm_to_vmem [thread:$0]  %s200, 8192, %s202, %s190, 256, 256, 16
        $region28: #{tpu_custom_call.1} parent=23 // pred_fallthru
          _
      $region24: #{tpu_custom_call.1} parent=5 // pred_fallthru
        _
      %p208 = scmp.le.s32.totalorder 1, %s21
      %p209 = scmp.lt.s32.totalorder %s21, 5
      %p210 = pnand %p208, %p209
      %p211 = pneg %p210
      // Predicated region
      $region29: #{tpu_custom_call.1} parent=5 // pred_check
        _
      $region30: #{tpu_custom_call.1} parent=5 // pred_check_branch
        %213 = sbr.rel (%p210) target = $region32
      $region31: #{tpu_custom_call.1} parent=5 // pred_region
        %s214 = ssub.s32 %s21, 1
        %s215 = sand.u32 %s34, 1
        %s216 = scalar_lea.sflag [#allocation3], %s215
        %s217 = sand.u32 %s34, 1
        %s218 = smul.addr %s217, 512
        %s219 = scalar_lea.vmem [#allocation2], %s218
        // Predicated region
        $region33: #{tpu_custom_call.1} parent=31 // pred_check
          %p220 = pneg %p47
        $region34: #{tpu_custom_call.1} parent=31 // pred_check_branch
          %222 = sbr.rel (%p220) target = $region36
        $region35: #{tpu_custom_call.1} parent=31 // pred_region
          %223 = dma.done %s216, 8192
        $region36: #{tpu_custom_call.1} parent=31 // pred_fallthru
          _
        // Predicated region
        $region37: #{tpu_custom_call.1} parent=31 // pred_check
          %p224 = pneg %p68
        $region38: #{tpu_custom_call.1} parent=31 // pred_check_branch
          %226 = sbr.rel (%p224) target = $region40
        $region39: #{tpu_custom_call.1} parent=31 // pred_region
          %227 = dma.done [#allocation6], 4096
        $region40: #{tpu_custom_call.1} parent=31 // pred_fallthru
          _
        // Predicated region
        $region41: #{tpu_custom_call.1} parent=31 // pred_check
          %p228 = pneg %p89
        $region42: #{tpu_custom_call.1} parent=31 // pred_check_branch
          %230 = sbr.rel (%p228) target = $region44
        $region43: #{tpu_custom_call.1} parent=31 // pred_region
          %231 = dma.done [#allocation6], 4096
        $region44: #{tpu_custom_call.1} parent=31 // pred_fallthru
          _
        %s232 = sand.u32 %s34, 1
        %s233 = scalar_lea.sflag [#allocation3], %s232
        %s234 = sand.u32 %s34, 1
        %s235 = smul.addr %s234, 512
        %s236 = scalar_lea.vmem [#allocation2], %s235
        %p237 = pneg %p47
        %p238 = pneg %p44
        %p239 = pneg %p68
        %p240 = pneg %p65
        %p241 = pneg %p89
        %p242 = pneg %p86
        %p243 = pneg %p115
        %p244 = pneg %p112
        %s245 = sand.u32 %s102, 1
        %s246 = scalar_lea.sflag [#allocation4], %s245
        %s247 = sand.u32 %s102, 1
        %s248 = smul.addr %s247, 256
        %s249 = scalar_lea.vmem [#allocation8], %s248
        %p250 = pneg %p141
        %p251 = pneg %p138
        %s252 = sand.u32 %s128, 1
        %s253 = scalar_lea.sflag [#allocation10], %s252
        %s254 = sand.u32 %s128, 1
        %s255 = smul.addr %s254, 256
        %s256 = scalar_lea.vmem [#allocation9], %s255
        %s257 = smul.u32 32, %s26
        %s258 = smul.u32 32, %s26
        %s259 = smul.u32 32, %s26
        %v260 = vld [vmem:[%s219] sm:$0xff]
        %v261 = vld [vmem:[%s219 + $0x8] sm:$0xff]
        %v262 = vld [vmem:[%s219 + $0x10] sm:$0xff]
        %v263 = vld [vmem:[%s219 + $0x18] sm:$0xff]
        %v264 = vld [vmem:[%s219 + $0x20] sm:$0xff]
        %v265 = vld [vmem:[%s219 + $0x28] sm:$0xff]
        %v266 = vld [vmem:[%s219 + $0x30] sm:$0xff]
        %v267 = vld [vmem:[%s219 + $0x38] sm:$0xff]
        %v268 = vld [vmem:[%s219 + $0x40] sm:$0xff]
        %v269 = vld [vmem:[%s219 + $0x48] sm:$0xff]
        %v270 = vld [vmem:[%s219 + $0x50] sm:$0xff]
        %v271 = vld [vmem:[%s219 + $0x58] sm:$0xff]
        %v272 = vld [vmem:[%s219 + $0x60] sm:$0xff]
        %v273 = vld [vmem:[%s219 + $0x68] sm:$0xff]
        %v274 = vld [vmem:[%s219 + $0x70] sm:$0xff]
        %v275 = vld [vmem:[%s219 + $0x78] sm:$0xff]
        %v276 = vld [vmem:[%s219 + $0x80] sm:$0xff]
        %v277 = vld [vmem:[%s219 + $0x88] sm:$0xff]
        %v278 = vld [vmem:[%s219 + $0x90] sm:$0xff]
        %v279 = vld [vmem:[%s219 + $0x98] sm:$0xff]
        %v280 = vld [vmem:[%s219 + $0xa0] sm:$0xff]
        %v281 = vld [vmem:[%s219 + $0xa8] sm:$0xff]
        %v282 = vld [vmem:[%s219 + $0xb0] sm:$0xff]
        %v283 = vld [vmem:[%s219 + $0xb8] sm:$0xff]
        %v284 = vld [vmem:[%s219 + $0xc0] sm:$0xff]
        %v285 = vld [vmem:[%s219 + $0xc8] sm:$0xff]
        %v286 = vld [vmem:[%s219 + $0xd0] sm:$0xff]
        %v287 = vld [vmem:[%s219 + $0xd8] sm:$0xff]
        %v288 = vld [vmem:[%s219 + $0xe0] sm:$0xff]
        %v289 = vld [vmem:[%s219 + $0xe8] sm:$0xff]
        %v290 = vld [vmem:[%s219 + $0xf0] sm:$0xff]
        %v291 = vld [vmem:[%s219 + $0xf8] sm:$0xff]
        %v292 = vld [vmem:[%s219 + $0x100] sm:$0xff]
        %v293 = vld [vmem:[%s219 + $0x108] sm:$0xff]
        %v294 = vld [vmem:[%s219 + $0x110] sm:$0xff]
        %v295 = vld [vmem:[%s219 + $0x118] sm:$0xff]
        %v296 = vld [vmem:[%s219 + $0x120] sm:$0xff]
        %v297 = vld [vmem:[%s219 + $0x128] sm:$0xff]
        %v298 = vld [vmem:[%s219 + $0x130] sm:$0xff]
        %v299 = vld [vmem:[%s219 + $0x138] sm:$0xff]
        %v300 = vld [vmem:[%s219 + $0x140] sm:$0xff]
        %v301 = vld [vmem:[%s219 + $0x148] sm:$0xff]
        %v302 = vld [vmem:[%s219 + $0x150] sm:$0xff]
        %v303 = vld [vmem:[%s219 + $0x158] sm:$0xff]
        %v304 = vld [vmem:[%s219 + $0x160] sm:$0xff]
        %v305 = vld [vmem:[%s219 + $0x168] sm:$0xff]
        %v306 = vld [vmem:[%s219 + $0x170] sm:$0xff]
        %v307 = vld [vmem:[%s219 + $0x178] sm:$0xff]
        %v308 = vld [vmem:[%s219 + $0x180] sm:$0xff]
        %v309 = vld [vmem:[%s219 + $0x188] sm:$0xff]
        %v310 = vld [vmem:[%s219 + $0x190] sm:$0xff]
        %v311 = vld [vmem:[%s219 + $0x198] sm:$0xff]
        %v312 = vld [vmem:[%s219 + $0x1a0] sm:$0xff]
        %v313 = vld [vmem:[%s219 + $0x1a8] sm:$0xff]
        %v314 = vld [vmem:[%s219 + $0x1b0] sm:$0xff]
        %v315 = vld [vmem:[%s219 + $0x1b8] sm:$0xff]
        %v316 = vld [vmem:[%s219 + $0x1c0] sm:$0xff]
        %v317 = vld [vmem:[%s219 + $0x1c8] sm:$0xff]
        %v318 = vld [vmem:[%s219 + $0x1d0] sm:$0xff]
        %v319 = vld [vmem:[%s219 + $0x1d8] sm:$0xff]
        %v320 = vld [vmem:[%s219 + $0x1e0] sm:$0xff]
        %v321 = vld [vmem:[%s219 + $0x1e8] sm:$0xff]
        %v322 = vld [vmem:[%s219 + $0x1f0] sm:$0xff]
        %v323 = vld [vmem:[%s219 + $0x1f8] sm:$0xff]
        %v324 = vld [vmem:[#allocation5] sm:$0xff]
        %v325 = vld [vmem:[#allocation5 + $0x8] sm:$0xff]
        %v326 = vld [vmem:[#allocation5 + $0x10] sm:$0xff]
        %v327 = vld [vmem:[#allocation5 + $0x18] sm:$0xff]
        %v328 = vld [vmem:[#allocation5 + $0x20] sm:$0xff]
        %v329 = vld [vmem:[#allocation5 + $0x28] sm:$0xff]
        %v330 = vld [vmem:[#allocation5 + $0x30] sm:$0xff]
        %v331 = vld [vmem:[#allocation5 + $0x38] sm:$0xff]
        %v332 = vld [vmem:[#allocation5 + $0x40] sm:$0xff]
        %v333 = vld [vmem:[#allocation5 + $0x48] sm:$0xff]
        %v334 = vld [vmem:[#allocation5 + $0x50] sm:$0xff]
        %v335 = vld [vmem:[#allocation5 + $0x58] sm:$0xff]
        %v336 = vld [vmem:[#allocation5 + $0x60] sm:$0xff]
        %v337 = vld [vmem:[#allocation5 + $0x68] sm:$0xff]
        %v338 = vld [vmem:[#allocation5 + $0x70] sm:$0xff]
        %v339 = vld [vmem:[#allocation5 + $0x78] sm:$0xff]
        %v340 = vld [vmem:[#allocation5 + $0x80] sm:$0xff]
        %v341 = vld [vmem:[#allocation5 + $0x88] sm:$0xff]
        %v342 = vld [vmem:[#allocation5 + $0x90] sm:$0xff]
        %v343 = vld [vmem:[#allocation5 + $0x98] sm:$0xff]
        %v344 = vld [vmem:[#allocation5 + $0xa0] sm:$0xff]
        %v345 = vld [vmem:[#allocation5 + $0xa8] sm:$0xff]
        %v346 = vld [vmem:[#allocation5 + $0xb0] sm:$0xff]
        %v347 = vld [vmem:[#allocation5 + $0xb8] sm:$0xff]
        %v348 = vld [vmem:[#allocation5 + $0xc0] sm:$0xff]
        %v349 = vld [vmem:[#allocation5 + $0xc8] sm:$0xff]
        %v350 = vld [vmem:[#allocation5 + $0xd0] sm:$0xff]
        %v351 = vld [vmem:[#allocation5 + $0xd8] sm:$0xff]
        %v352 = vld [vmem:[#allocation5 + $0xe0] sm:$0xff]
        %v353 = vld [vmem:[#allocation5 + $0xe8] sm:$0xff]
        %v354 = vld [vmem:[#allocation5 + $0xf0] sm:$0xff]
        %v355 = vld [vmem:[#allocation5 + $0xf8] sm:$0xff]
        %356 = vmatprep.subr.mxu0 0.0
        %357 = vmatpush1.msra.mxu0 %v339
        %358 = vmatprep.subr.mxu0 0.0
        %359 = vmatpush1.msra.mxu0 %v338
        %360 = vmatprep.subr.mxu0 0.0
        %361 = vmatpush1.msra.mxu0 %v337
        %362 = vmatprep.subr.mxu0 0.0
        %363 = vmatpush1.msra.mxu0 %v336
        %364 = vmatprep.subr.mxu0 0.0
        %365 = vmatpush1.msra.mxu0 %v335
        %366 = vmatprep.subr.mxu0 0.0
        %367 = vmatpush1.msra.mxu0 %v334
        %368 = vmatprep.subr.mxu0 0.0
        %369 = vmatpush1.msra.mxu0 %v333
        %370 = vmatprep.subr.mxu0 0.0
        %371 = vmatpush1.msra.mxu0 %v332
        %372 = vmatprep.subr.mxu0 0.0
        %373 = vmatpush1.msra.mxu0 %v331
        %374 = vmatprep.subr.mxu0 0.0
        %375 = vmatpush1.msra.mxu0 %v330
        %376 = vmatprep.subr.mxu0 0.0
        %377 = vmatpush1.msra.mxu0 %v329
        %378 = vmatprep.subr.mxu0 0.0
        %379 = vmatpush1.msra.mxu0 %v328
        %380 = vmatprep.subr.mxu0 0.0
        %381 = vmatpush1.msra.mxu0 %v327
        %382 = vmatprep.subr.mxu0 0.0
        %383 = vmatpush1.msra.mxu0 %v326
        %384 = vmatprep.subr.mxu0 0.0
        %385 = vmatpush1.msra.mxu0 %v325
        %386 = vmatprep.subr.mxu0 0.0
        %387 = vmatpush1.msra.mxu0 %v324
        %388 = vmatprep.subr.mxu0 0.0
        %389 = vmatpush2.msra.mxu0 %v355
        %390 = vmatprep.subr.mxu0 0.0
        %391 = vmatpush2.msra.mxu0 %v354
        %392 = vmatprep.subr.mxu0 0.0
        %393 = vmatpush2.msra.mxu0 %v353
        %394 = vmatprep.subr.mxu0 0.0
        %395 = vmatpush2.msra.mxu0 %v352
        %396 = vmatprep.subr.mxu0 0.0
        %397 = vmatpush2.msra.mxu0 %v351
        %398 = vmatprep.subr.mxu0 0.0
        %399 = vmatpush2.msra.mxu0 %v350
        %400 = vmatprep.subr.mxu0 0.0
        %401 = vmatpush2.msra.mxu0 %v349
        %402 = vmatprep.subr.mxu0 0.0
        %403 = vmatpush2.msra.mxu0 %v348
        %404 = vmatprep.subr.mxu0 0.0
        %405 = vmatpush2.msra.mxu0 %v347
        %406 = vmatprep.subr.mxu0 0.0
        %407 = vmatpush2.msra.mxu0 %v346
        %408 = vmatprep.subr.mxu0 0.0
        %409 = vmatpush2.msra.mxu0 %v345
        %410 = vmatprep.subr.mxu0 0.0
        %411 = vmatpush2.msra.mxu0 %v344
        %412 = vmatprep.subr.mxu0 0.0
        %413 = vmatpush2.msra.mxu0 %v343
        %414 = vmatprep.subr.mxu0 0.0
        %415 = vmatpush2.msra.mxu0 %v342
        %416 = vmatprep.subr.mxu0 0.0
        %417 = vmatpush2.msra.mxu0 %v341
        %418 = vmatprep.subr.mxu0 0.0
        %419 = vmatpush2.msra.mxu0 %v340
        %420 = vmatprep.mubr.f32.mxu0 %v261
        %421 = vmatmul.mubr.f32.gmra.mxu0 %v260
        %v422 = vpop.f32.mrf.mxu0
        %v423 = vadd.f32 0.0, %v422
        %v424 = vpop.f32.mrf.mxu0
        %425 = vmatprep.mubr.f32.mxu0 %v263
        %426 = vmatmul.mubr.f32.gmra.mxu0 %v262
        %v427 = vpop.f32.mrf.mxu0
        %v428 = vadd.f32 0.0, %v427
        %v429 = vpop.f32.mrf.mxu0
        %430 = vmatprep.mubr.f32.mxu0 %v265
        %431 = vmatmul.mubr.f32.gmra.mxu0 %v264
        %v432 = vpop.f32.mrf.mxu0
        %v433 = vadd.f32 0.0, %v432
        %v434 = vpop.f32.mrf.mxu0
        %435 = vmatprep.mubr.f32.mxu0 %v267
        %436 = vmatmul.mubr.f32.gmra.mxu0 %v266
        %v437 = vpop.f32.mrf.mxu0
        %v438 = vadd.f32 0.0, %v437
        %v439 = vpop.f32.mrf.mxu0
        %440 = vmatprep.mubr.f32.mxu0 %v269
        %441 = vmatmul.mubr.f32.gmra.mxu0 %v268
        %v442 = vpop.f32.mrf.mxu0
        %v443 = vadd.f32 0.0, %v442
        %v444 = vpop.f32.mrf.mxu0
        %445 = vmatprep.mubr.f32.mxu0 %v271
        %446 = vmatmul.mubr.f32.gmra.mxu0 %v270
        %v447 = vpop.f32.mrf.mxu0
        %v448 = vadd.f32 0.0, %v447
        %v449 = vpop.f32.mrf.mxu0
        %450 = vmatprep.mubr.f32.mxu0 %v273
        %451 = vmatmul.mubr.f32.gmra.mxu0 %v272
        %v452 = vpop.f32.mrf.mxu0
        %v453 = vadd.f32 0.0, %v452
        %v454 = vpop.f32.mrf.mxu0
        %455 = vmatprep.mubr.f32.mxu0 %v275
        %456 = vmatmul.mubr.f32.gmra.mxu0 %v274
        %v457 = vpop.f32.mrf.mxu0
        %v458 = vadd.f32 0.0, %v457
        %v459 = vpop.f32.mrf.mxu0
        %460 = vmatprep.mubr.f32.mxu0 %v277
        %461 = vmatmul.mubr.f32.gmra.mxu0 %v276
        %v462 = vpop.f32.mrf.mxu0
        %v463 = vadd.f32 0.0, %v462
        %v464 = vpop.f32.mrf.mxu0
        %465 = vmatprep.mubr.f32.mxu0 %v279
        %466 = vmatmul.mubr.f32.gmra.mxu0 %v278
        %v467 = vpop.f32.mrf.mxu0
        %v468 = vadd.f32 0.0, %v467
        %v469 = vpop.f32.mrf.mxu0
        %470 = vmatprep.mubr.f32.mxu0 %v281
        %471 = vmatmul.mubr.f32.gmra.mxu0 %v280
        %v472 = vpop.f32.mrf.mxu0
        %v473 = vadd.f32 0.0, %v472
        %v474 = vpop.f32.mrf.mxu0
        %475 = vmatprep.mubr.f32.mxu0 %v283
        %476 = vmatmul.mubr.f32.gmra.mxu0 %v282
        %v477 = vpop.f32.mrf.mxu0
        %v478 = vadd.f32 0.0, %v477
        %v479 = vpop.f32.mrf.mxu0
        %480 = vmatprep.mubr.f32.mxu0 %v285
        %481 = vmatmul.mubr.f32.gmra.mxu0 %v284
        %v482 = vpop.f32.mrf.mxu0
        %v483 = vadd.f32 0.0, %v482
        %v484 = vpop.f32.mrf.mxu0
        %485 = vmatprep.mubr.f32.mxu0 %v287
        %486 = vmatmul.mubr.f32.gmra.mxu0 %v286
        %v487 = vpop.f32.mrf.mxu0
        %v488 = vadd.f32 0.0, %v487
        %v489 = vpop.f32.mrf.mxu0
        %490 = vmatprep.mubr.f32.mxu0 %v289
        %491 = vmatmul.mubr.f32.gmra.mxu0 %v288
        %v492 = vpop.f32.mrf.mxu0
        %v493 = vadd.f32 0.0, %v492
        %v494 = vpop.f32.mrf.mxu0
        %495 = vmatprep.mubr.f32.mxu0 %v291
        %496 = vmatmul.mubr.f32.gmra.mxu0 %v290
        %v497 = vpop.f32.mrf.mxu0
        %v498 = vadd.f32 0.0, %v497
        %v499 = vpop.f32.mrf.mxu0
        %500 = vmatprep.mubr.f32.mxu0 %v293
        %501 = vmatmul.mubr.f32.gmra.mxu0 %v292
        %v502 = vpop.f32.mrf.mxu0
        %v503 = vadd.f32 0.0, %v502
        %v504 = vpop.f32.mrf.mxu0
        %505 = vmatprep.mubr.f32.mxu0 %v295
        %506 = vmatmul.mubr.f32.gmra.mxu0 %v294
        %v507 = vpop.f32.mrf.mxu0
        %v508 = vadd.f32 0.0, %v507
        %v509 = vpop.f32.mrf.mxu0
        %510 = vmatprep.mubr.f32.mxu0 %v297
        %511 = vmatmul.mubr.f32.gmra.mxu0 %v296
        %v512 = vpop.f32.mrf.mxu0
        %v513 = vadd.f32 0.0, %v512
        %v514 = vpop.f32.mrf.mxu0
        %515 = vmatprep.mubr.f32.mxu0 %v299
        %516 = vmatmul.mubr.f32.gmra.mxu0 %v298
        %v517 = vpop.f32.mrf.mxu0
        %v518 = vadd.f32 0.0, %v517
        %v519 = vpop.f32.mrf.mxu0
        %520 = vmatprep.mubr.f32.mxu0 %v301
        %521 = vmatmul.mubr.f32.gmra.mxu0 %v300
        %v522 = vpop.f32.mrf.mxu0
        %v523 = vadd.f32 0.0, %v522
        %v524 = vpop.f32.mrf.mxu0
        %525 = vmatprep.mubr.f32.mxu0 %v303
        %526 = vmatmul.mubr.f32.gmra.mxu0 %v302
        %v527 = vpop.f32.mrf.mxu0
        %v528 = vadd.f32 0.0, %v527
        %v529 = vpop.f32.mrf.mxu0
        %530 = vmatprep.mubr.f32.mxu0 %v305
        %531 = vmatmul.mubr.f32.gmra.mxu0 %v304
        %v532 = vpop.f32.mrf.mxu0
        %v533 = vadd.f32 0.0, %v532
        %v534 = vpop.f32.mrf.mxu0
        %535 = vmatprep.mubr.f32.mxu0 %v307
        %536 = vmatmul.mubr.f32.gmra.mxu0 %v306
        %v537 = vpop.f32.mrf.mxu0
        %v538 = vadd.f32 0.0, %v537
        %v539 = vpop.f32.mrf.mxu0
        %540 = vmatprep.mubr.f32.mxu0 %v309
        %541 = vmatmul.mubr.f32.gmra.mxu0 %v308
        %v542 = vpop.f32.mrf.mxu0
        %v543 = vadd.f32 0.0, %v542
        %v544 = vpop.f32.mrf.mxu0
        %545 = vmatprep.mubr.f32.mxu0 %v311
        %546 = vmatmul.mubr.f32.gmra.mxu0 %v310
        %v547 = vpop.f32.mrf.mxu0
        %v548 = vadd.f32 0.0, %v547
        %v549 = vpop.f32.mrf.mxu0
        %550 = vmatprep.mubr.f32.mxu0 %v313
        %551 = vmatmul.mubr.f32.gmra.mxu0 %v312
        %v552 = vpop.f32.mrf.mxu0
        %v553 = vadd.f32 0.0, %v552
        %v554 = vpop.f32.mrf.mxu0
        %555 = vmatprep.mubr.f32.mxu0 %v315
        %556 = vmatmul.mubr.f32.gmra.mxu0 %v314
        %v557 = vpop.f32.mrf.mxu0
        %v558 = vadd.f32 0.0, %v557
        %v559 = vpop.f32.mrf.mxu0
        %560 = vmatprep.mubr.f32.mxu0 %v317
        %561 = vmatmul.mubr.f32.gmra.mxu0 %v316
        %v562 = vpop.f32.mrf.mxu0
        %v563 = vadd.f32 0.0, %v562
        %v564 = vpop.f32.mrf.mxu0
        %565 = vmatprep.mubr.f32.mxu0 %v319
        %566 = vmatmul.mubr.f32.gmra.mxu0 %v318
        %v567 = vpop.f32.mrf.mxu0
        %v568 = vadd.f32 0.0, %v567
        %v569 = vpop.f32.mrf.mxu0
        %570 = vmatprep.mubr.f32.mxu0 %v321
        %571 = vmatmul.mubr.f32.gmra.mxu0 %v320
        %v572 = vpop.f32.mrf.mxu0
        %v573 = vadd.f32 0.0, %v572
        %v574 = vpop.f32.mrf.mxu0
        %575 = vmatprep.mubr.f32.mxu0 %v323
        %576 = vmatmul.mubr.f32.gmra.mxu0 %v322
        %v577 = vpop.f32.mrf.mxu0
        %v578 = vadd.f32 0.0, %v577
        %v579 = vpop.f32.mrf.mxu0
        %580 = vdwg.mxu0
        %581 = vst [vmem:[%s249] sm:$0xff] %v423
        %582 = vst [vmem:[%s249 + $0x8] sm:$0xff] %v428
        %583 = vst [vmem:[%s249 + $0x10] sm:$0xff] %v433
        %584 = vst [vmem:[%s249 + $0x18] sm:$0xff] %v438
        %585 = vst [vmem:[%s249 + $0x20] sm:$0xff] %v443
        %586 = vst [vmem:[%s249 + $0x28] sm:$0xff] %v448
        %587 = vst [vmem:[%s249 + $0x30] sm:$0xff] %v453
        %588 = vst [vmem:[%s249 + $0x38] sm:$0xff] %v458
        %589 = vst [vmem:[%s249 + $0x40] sm:$0xff] %v463
        %590 = vst [vmem:[%s249 + $0x48] sm:$0xff] %v468
        %591 = vst [vmem:[%s249 + $0x50] sm:$0xff] %v473
        %592 = vst [vmem:[%s249 + $0x58] sm:$0xff] %v478
        %593 = vst [vmem:[%s249 + $0x60] sm:$0xff] %v483
        %594 = vst [vmem:[%s249 + $0x68] sm:$0xff] %v488
        %595 = vst [vmem:[%s249 + $0x70] sm:$0xff] %v493
        %596 = vst [vmem:[%s249 + $0x78] sm:$0xff] %v498
        %597 = vst [vmem:[%s249 + $0x80] sm:$0xff] %v503
        %598 = vst [vmem:[%s249 + $0x88] sm:$0xff] %v508
        %599 = vst [vmem:[%s249 + $0x90] sm:$0xff] %v513
        %600 = vst [vmem:[%s249 + $0x98] sm:$0xff] %v518
        %601 = vst [vmem:[%s249 + $0xa0] sm:$0xff] %v523
        %602 = vst [vmem:[%s249 + $0xa8] sm:$0xff] %v528
        %603 = vst [vmem:[%s249 + $0xb0] sm:$0xff] %v533
        %604 = vst [vmem:[%s249 + $0xb8] sm:$0xff] %v538
        %605 = vst [vmem:[%s249 + $0xc0] sm:$0xff] %v543
        %606 = vst [vmem:[%s249 + $0xc8] sm:$0xff] %v548
        %607 = vst [vmem:[%s249 + $0xd0] sm:$0xff] %v553
        %608 = vst [vmem:[%s249 + $0xd8] sm:$0xff] %v558
        %609 = vst [vmem:[%s249 + $0xe0] sm:$0xff] %v563
        %610 = vst [vmem:[%s249 + $0xe8] sm:$0xff] %v568
        %611 = vst [vmem:[%s249 + $0xf0] sm:$0xff] %v573
        %612 = vst [vmem:[%s249 + $0xf8] sm:$0xff] %v578
        %v613 = vld [vmem:[#allocation7] sm:$0xff]
        %v614 = vld [vmem:[#allocation7 + $0x8] sm:$0xff]
        %v615 = vld [vmem:[#allocation7 + $0x10] sm:$0xff]
        %v616 = vld [vmem:[#allocation7 + $0x18] sm:$0xff]
        %v617 = vld [vmem:[#allocation7 + $0x20] sm:$0xff]
        %v618 = vld [vmem:[#allocation7 + $0x28] sm:$0xff]
        %v619 = vld [vmem:[#allocation7 + $0x30] sm:$0xff]
        %v620 = vld [vmem:[#allocation7 + $0x38] sm:$0xff]
        %v621 = vld [vmem:[#allocation7 + $0x40] sm:$0xff]
        %v622 = vld [vmem:[#allocation7 + $0x48] sm:$0xff]
        %v623 = vld [vmem:[#allocation7 + $0x50] sm:$0xff]
        %v624 = vld [vmem:[#allocation7 + $0x58] sm:$0xff]
        %v625 = vld [vmem:[#allocation7 + $0x60] sm:$0xff]
        %v626 = vld [vmem:[#allocation7 + $0x68] sm:$0xff]
        %v627 = vld [vmem:[#allocation7 + $0x70] sm:$0xff]
        %v628 = vld [vmem:[#allocation7 + $0x78] sm:$0xff]
        %v629 = vld [vmem:[#allocation7 + $0x80] sm:$0xff]
        %v630 = vld [vmem:[#allocation7 + $0x88] sm:$0xff]
        %v631 = vld [vmem:[#allocation7 + $0x90] sm:$0xff]
        %v632 = vld [vmem:[#allocation7 + $0x98] sm:$0xff]
        %v633 = vld [vmem:[#allocation7 + $0xa0] sm:$0xff]
        %v634 = vld [vmem:[#allocation7 + $0xa8] sm:$0xff]
        %v635 = vld [vmem:[#allocation7 + $0xb0] sm:$0xff]
        %v636 = vld [vmem:[#allocation7 + $0xb8] sm:$0xff]
        %v637 = vld [vmem:[#allocation7 + $0xc0] sm:$0xff]
        %v638 = vld [vmem:[#allocation7 + $0xc8] sm:$0xff]
        %v639 = vld [vmem:[#allocation7 + $0xd0] sm:$0xff]
        %v640 = vld [vmem:[#allocation7 + $0xd8] sm:$0xff]
        %v641 = vld [vmem:[#allocation7 + $0xe0] sm:$0xff]
        %v642 = vld [vmem:[#allocation7 + $0xe8] sm:$0xff]
        %v643 = vld [vmem:[#allocation7 + $0xf0] sm:$0xff]
        %v644 = vld [vmem:[#allocation7 + $0xf8] sm:$0xff]
        %645 = vmatprep.subr.mxu0 0.0
        %646 = vmatpush1.msra.mxu0 %v628
        %647 = vmatprep.subr.mxu0 0.0
        %648 = vmatpush1.msra.mxu0 %v627
        %649 = vmatprep.subr.mxu0 0.0
        %650 = vmatpush1.msra.mxu0 %v626
        %651 = vmatprep.subr.mxu0 0.0
        %652 = vmatpush1.msra.mxu0 %v625
        %653 = vmatprep.subr.mxu0 0.0
        %654 = vmatpush1.msra.mxu0 %v624
        %655 = vmatprep.subr.mxu0 0.0
        %656 = vmatpush1.msra.mxu0 %v623
        %657 = vmatprep.subr.mxu0 0.0
        %658 = vmatpush1.msra.mxu0 %v622
        %659 = vmatprep.subr.mxu0 0.0
        %660 = vmatpush1.msra.mxu0 %v621
        %661 = vmatprep.subr.mxu0 0.0
        %662 = vmatpush1.msra.mxu0 %v620
        %663 = vmatprep.subr.mxu0 0.0
        %664 = vmatpush1.msra.mxu0 %v619
        %665 = vmatprep.subr.mxu0 0.0
        %666 = vmatpush1.msra.mxu0 %v618
        %667 = vmatprep.subr.mxu0 0.0
        %668 = vmatpush1.msra.mxu0 %v617
        %669 = vmatprep.subr.mxu0 0.0
        %670 = vmatpush1.msra.mxu0 %v616
        %671 = vmatprep.subr.mxu0 0.0
        %672 = vmatpush1.msra.mxu0 %v615
        %673 = vmatprep.subr.mxu0 0.0
        %674 = vmatpush1.msra.mxu0 %v614
        %675 = vmatprep.subr.mxu0 0.0
        %676 = vmatpush1.msra.mxu0 %v613
        %677 = vmatprep.subr.mxu0 0.0
        %678 = vmatpush2.msra.mxu0 %v644
        %679 = vmatprep.subr.mxu0 0.0
        %680 = vmatpush2.msra.mxu0 %v643
        %681 = vmatprep.subr.mxu0 0.0
        %682 = vmatpush2.msra.mxu0 %v642
        %683 = vmatprep.subr.mxu0 0.0
        %684 = vmatpush2.msra.mxu0 %v641
        %685 = vmatprep.subr.mxu0 0.0
        %686 = vmatpush2.msra.mxu0 %v640
        %687 = vmatprep.subr.mxu0 0.0
        %688 = vmatpush2.msra.mxu0 %v639
        %689 = vmatprep.subr.mxu0 0.0
        %690 = vmatpush2.msra.mxu0 %v638
        %691 = vmatprep.subr.mxu0 0.0
        %692 = vmatpush2.msra.mxu0 %v637
        %693 = vmatprep.subr.mxu0 0.0
        %694 = vmatpush2.msra.mxu0 %v636
        %695 = vmatprep.subr.mxu0 0.0
        %696 = vmatpush2.msra.mxu0 %v635
        %697 = vmatprep.subr.mxu0 0.0
        %698 = vmatpush2.msra.mxu0 %v634
        %699 = vmatprep.subr.mxu0 0.0
        %700 = vmatpush2.msra.mxu0 %v633
        %701 = vmatprep.subr.mxu0 0.0
        %702 = vmatpush2.msra.mxu0 %v632
        %703 = vmatprep.subr.mxu0 0.0
        %704 = vmatpush2.msra.mxu0 %v631
        %705 = vmatprep.subr.mxu0 0.0
        %706 = vmatpush2.msra.mxu0 %v630
        %707 = vmatprep.subr.mxu0 0.0
        %708 = vmatpush2.msra.mxu0 %v629
        %709 = vmatprep.mubr.f32.mxu0 %v261
        %710 = vmatmul.mubr.f32.gmra.mxu0 %v260
        %v711 = vpop.f32.mrf.mxu0
        %v712 = vadd.f32 0.0, %v711
        %v713 = vpop.f32.mrf.mxu0
        %714 = vmatprep.mubr.f32.mxu0 %v263
        %715 = vmatmul.mubr.f32.gmra.mxu0 %v262
        %v716 = vpop.f32.mrf.mxu0
        %v717 = vadd.f32 0.0, %v716
        %v718 = vpop.f32.mrf.mxu0
        %719 = vmatprep.mubr.f32.mxu0 %v265
        %720 = vmatmul.mubr.f32.gmra.mxu0 %v264
        %v721 = vpop.f32.mrf.mxu0
        %v722 = vadd.f32 0.0, %v721
        %v723 = vpop.f32.mrf.mxu0
        %724 = vmatprep.mubr.f32.mxu0 %v267
        %725 = vmatmul.mubr.f32.gmra.mxu0 %v266
        %v726 = vpop.f32.mrf.mxu0
        %v727 = vadd.f32 0.0, %v726
        %v728 = vpop.f32.mrf.mxu0
        %729 = vmatprep.mubr.f32.mxu0 %v269
        %730 = vmatmul.mubr.f32.gmra.mxu0 %v268
        %v731 = vpop.f32.mrf.mxu0
        %v732 = vadd.f32 0.0, %v731
        %v733 = vpop.f32.mrf.mxu0
        %734 = vmatprep.mubr.f32.mxu0 %v271
        %735 = vmatmul.mubr.f32.gmra.mxu0 %v270
        %v736 = vpop.f32.mrf.mxu0
        %v737 = vadd.f32 0.0, %v736
        %v738 = vpop.f32.mrf.mxu0
        %739 = vmatprep.mubr.f32.mxu0 %v273
        %740 = vmatmul.mubr.f32.gmra.mxu0 %v272
        %v741 = vpop.f32.mrf.mxu0
        %v742 = vadd.f32 0.0, %v741
        %v743 = vpop.f32.mrf.mxu0
        %744 = vmatprep.mubr.f32.mxu0 %v275
        %745 = vmatmul.mubr.f32.gmra.mxu0 %v274
        %v746 = vpop.f32.mrf.mxu0
        %v747 = vadd.f32 0.0, %v746
        %v748 = vpop.f32.mrf.mxu0
        %749 = vmatprep.mubr.f32.mxu0 %v277
        %750 = vmatmul.mubr.f32.gmra.mxu0 %v276
        %v751 = vpop.f32.mrf.mxu0
        %v752 = vadd.f32 0.0, %v751
        %v753 = vpop.f32.mrf.mxu0
        %754 = vmatprep.mubr.f32.mxu0 %v279
        %755 = vmatmul.mubr.f32.gmra.mxu0 %v278
        %v756 = vpop.f32.mrf.mxu0
        %v757 = vadd.f32 0.0, %v756
        %v758 = vpop.f32.mrf.mxu0
        %759 = vmatprep.mubr.f32.mxu0 %v281
        %760 = vmatmul.mubr.f32.gmra.mxu0 %v280
        %v761 = vpop.f32.mrf.mxu0
        %v762 = vadd.f32 0.0, %v761
        %v763 = vpop.f32.mrf.mxu0
        %764 = vmatprep.mubr.f32.mxu0 %v283
        %765 = vmatmul.mubr.f32.gmra.mxu0 %v282
        %v766 = vpop.f32.mrf.mxu0
        %v767 = vadd.f32 0.0, %v766
        %v768 = vpop.f32.mrf.mxu0
        %769 = vmatprep.mubr.f32.mxu0 %v285
        %770 = vmatmul.mubr.f32.gmra.mxu0 %v284
        %v771 = vpop.f32.mrf.mxu0
        %v772 = vadd.f32 0.0, %v771
        %v773 = vpop.f32.mrf.mxu0
        %774 = vmatprep.mubr.f32.mxu0 %v287
        %775 = vmatmul.mubr.f32.gmra.mxu0 %v286
        %v776 = vpop.f32.mrf.mxu0
        %v777 = vadd.f32 0.0, %v776
        %v778 = vpop.f32.mrf.mxu0
        %779 = vmatprep.mubr.f32.mxu0 %v289
        %780 = vmatmul.mubr.f32.gmra.mxu0 %v288
        %v781 = vpop.f32.mrf.mxu0
        %v782 = vadd.f32 0.0, %v781
        %v783 = vpop.f32.mrf.mxu0
        %784 = vmatprep.mubr.f32.mxu0 %v291
        %785 = vmatmul.mubr.f32.gmra.mxu0 %v290
        %v786 = vpop.f32.mrf.mxu0
        %v787 = vadd.f32 0.0, %v786
        %v788 = vpop.f32.mrf.mxu0
        %789 = vmatprep.mubr.f32.mxu0 %v293
        %790 = vmatmul.mubr.f32.gmra.mxu0 %v292
        %v791 = vpop.f32.mrf.mxu0
        %v792 = vadd.f32 0.0, %v791
        %v793 = vpop.f32.mrf.mxu0
        %794 = vmatprep.mubr.f32.mxu0 %v295
        %795 = vmatmul.mubr.f32.gmra.mxu0 %v294
        %v796 = vpop.f32.mrf.mxu0
        %v797 = vadd.f32 0.0, %v796
        %v798 = vpop.f32.mrf.mxu0
        %799 = vmatprep.mubr.f32.mxu0 %v297
        %800 = vmatmul.mubr.f32.gmra.mxu0 %v296
        %v801 = vpop.f32.mrf.mxu0
        %v802 = vadd.f32 0.0, %v801
        %v803 = vpop.f32.mrf.mxu0
        %804 = vmatprep.mubr.f32.mxu0 %v299
        %805 = vmatmul.mubr.f32.gmra.mxu0 %v298
        %v806 = vpop.f32.mrf.mxu0
        %v807 = vadd.f32 0.0, %v806
        %v808 = vpop.f32.mrf.mxu0
        %809 = vmatprep.mubr.f32.mxu0 %v301
        %810 = vmatmul.mubr.f32.gmra.mxu0 %v300
        %v811 = vpop.f32.mrf.mxu0
        %v812 = vadd.f32 0.0, %v811
        %v813 = vpop.f32.mrf.mxu0
        %814 = vmatprep.mubr.f32.mxu0 %v303
        %815 = vmatmul.mubr.f32.gmra.mxu0 %v302
        %v816 = vpop.f32.mrf.mxu0
        %v817 = vadd.f32 0.0, %v816
        %v818 = vpop.f32.mrf.mxu0
        %819 = vmatprep.mubr.f32.mxu0 %v305
        %820 = vmatmul.mubr.f32.gmra.mxu0 %v304
        %v821 = vpop.f32.mrf.mxu0
        %v822 = vadd.f32 0.0, %v821
        %v823 = vpop.f32.mrf.mxu0
        %824 = vmatprep.mubr.f32.mxu0 %v307
        %825 = vmatmul.mubr.f32.gmra.mxu0 %v306
        %v826 = vpop.f32.mrf.mxu0
        %v827 = vadd.f32 0.0, %v826
        %v828 = vpop.f32.mrf.mxu0
        %829 = vmatprep.mubr.f32.mxu0 %v309
        %830 = vmatmul.mubr.f32.gmra.mxu0 %v308
        %v831 = vpop.f32.mrf.mxu0
        %v832 = vadd.f32 0.0, %v831
        %v833 = vpop.f32.mrf.mxu0
        %834 = vmatprep.mubr.f32.mxu0 %v311
        %835 = vmatmul.mubr.f32.gmra.mxu0 %v310
        %v836 = vpop.f32.mrf.mxu0
        %v837 = vadd.f32 0.0, %v836
        %v838 = vpop.f32.mrf.mxu0
        %839 = vmatprep.mubr.f32.mxu0 %v313
        %840 = vmatmul.mubr.f32.gmra.mxu0 %v312
        %v841 = vpop.f32.mrf.mxu0
        %v842 = vadd.f32 0.0, %v841
        %v843 = vpop.f32.mrf.mxu0
        %844 = vmatprep.mubr.f32.mxu0 %v315
        %845 = vmatmul.mubr.f32.gmra.mxu0 %v314
        %v846 = vpop.f32.mrf.mxu0
        %v847 = vadd.f32 0.0, %v846
        %v848 = vpop.f32.mrf.mxu0
        %849 = vmatprep.mubr.f32.mxu0 %v317
        %850 = vmatmul.mubr.f32.gmra.mxu0 %v316
        %v851 = vpop.f32.mrf.mxu0
        %v852 = vadd.f32 0.0, %v851
        %v853 = vpop.f32.mrf.mxu0
        %854 = vmatprep.mubr.f32.mxu0 %v319
        %855 = vmatmul.mubr.f32.gmra.mxu0 %v318
        %v856 = vpop.f32.mrf.mxu0
        %v857 = vadd.f32 0.0, %v856
        %v858 = vpop.f32.mrf.mxu0
        %859 = vmatprep.mubr.f32.mxu0 %v321
        %860 = vmatmul.mubr.f32.gmra.mxu0 %v320
        %v861 = vpop.f32.mrf.mxu0
        %v862 = vadd.f32 0.0, %v861
        %v863 = vpop.f32.mrf.mxu0
        %864 = vmatprep.mubr.f32.mxu0 %v323
        %865 = vmatmul.mubr.f32.gmra.mxu0 %v322
        %v866 = vpop.f32.mrf.mxu0
        %v867 = vadd.f32 0.0, %v866
        %v868 = vpop.f32.mrf.mxu0
        %869 = vdwg.mxu0
        %870 = vst [vmem:[%s256] sm:$0xff] %v712
        %871 = vst [vmem:[%s256 + $0x8] sm:$0xff] %v717
        %872 = vst [vmem:[%s256 + $0x10] sm:$0xff] %v722
        %873 = vst [vmem:[%s256 + $0x18] sm:$0xff] %v727
        %874 = vst [vmem:[%s256 + $0x20] sm:$0xff] %v732
        %875 = vst [vmem:[%s256 + $0x28] sm:$0xff] %v737
        %876 = vst [vmem:[%s256 + $0x30] sm:$0xff] %v742
        %877 = vst [vmem:[%s256 + $0x38] sm:$0xff] %v747
        %878 = vst [vmem:[%s256 + $0x40] sm:$0xff] %v752
        %879 = vst [vmem:[%s256 + $0x48] sm:$0xff] %v757
        %880 = vst [vmem:[%s256 + $0x50] sm:$0xff] %v762
        %881 = vst [vmem:[%s256 + $0x58] sm:$0xff] %v767
        %882 = vst [vmem:[%s256 + $0x60] sm:$0xff] %v772
        %883 = vst [vmem:[%s256 + $0x68] sm:$0xff] %v777
        %884 = vst [vmem:[%s256 + $0x70] sm:$0xff] %v782
        %885 = vst [vmem:[%s256 + $0x78] sm:$0xff] %v787
        %886 = vst [vmem:[%s256 + $0x80] sm:$0xff] %v792
        %887 = vst [vmem:[%s256 + $0x88] sm:$0xff] %v797
        %888 = vst [vmem:[%s256 + $0x90] sm:$0xff] %v802
        %889 = vst [vmem:[%s256 + $0x98] sm:$0xff] %v807
        %890 = vst [vmem:[%s256 + $0xa0] sm:$0xff] %v812
        %891 = vst [vmem:[%s256 + $0xa8] sm:$0xff] %v817
        %892 = vst [vmem:[%s256 + $0xb0] sm:$0xff] %v822
        %893 = vst [vmem:[%s256 + $0xb8] sm:$0xff] %v827
        %894 = vst [vmem:[%s256 + $0xc0] sm:$0xff] %v832
        %895 = vst [vmem:[%s256 + $0xc8] sm:$0xff] %v837
        %896 = vst [vmem:[%s256 + $0xd0] sm:$0xff] %v842
        %897 = vst [vmem:[%s256 + $0xd8] sm:$0xff] %v847
        %898 = vst [vmem:[%s256 + $0xe0] sm:$0xff] %v852
        %899 = vst [vmem:[%s256 + $0xe8] sm:$0xff] %v857
        %900 = vst [vmem:[%s256 + $0xf0] sm:$0xff] %v862
        %901 = vst [vmem:[%s256 + $0xf8] sm:$0xff] %v867
        %s902 = sand.u32 %s102, 1
        %s903 = scalar_lea.sflag [#allocation4], %s902
        %s904 = sand.u32 %s102, 1
        %s905 = smul.addr %s904, 256
        %s906 = scalar_lea.vmem [#allocation8], %s905
        %s907 = sand.u32 %s128, 1
        %s908 = scalar_lea.sflag [#allocation10], %s907
        %s909 = sand.u32 %s128, 1
        %s910 = smul.addr %s909, 256
        %s911 = scalar_lea.vmem [#allocation9], %s910
        // Predicated region
        $region45: #{tpu_custom_call.1} parent=31 // pred_check
          %p912 = pneg %p112
        $region46: #{tpu_custom_call.1} parent=31 // pred_check_branch
          %914 = sbr.rel (%p912) target = $region48
        $region47: #{tpu_custom_call.1} parent=31 // pred_region
          %s915 = smul.u32 32, %s26
          %s917 = ssub.s32 4096, 4096
          %918 = vsyncadd %s903, %s917
          %s919 = smul.addr %s915, 128
          %s920 = scalar_lea.hbm %s3, %s919
          %s921 = sshll.u32 %s906, 4
          %s922 = int_to_ptr.vmem [resolvable:$true] %s921
          %927 = dma.vmem_to_hbm [thread:$0]  %s922, 4096, %s920, %s903, 128, 128, 8
        $region48: #{tpu_custom_call.1} parent=31 // pred_fallthru
          _
        // Predicated region
        $region49: #{tpu_custom_call.1} parent=31 // pred_check
          %p928 = pneg %p138
        $region50: #{tpu_custom_call.1} parent=31 // pred_check_branch
          %930 = sbr.rel (%p928) target = $region52
        $region51: #{tpu_custom_call.1} parent=31 // pred_region
          %s931 = smul.u32 32, %s26
          %s933 = ssub.s32 4096, 4096
          %934 = vsyncadd %s908, %s933
          %s935 = smul.addr %s931, 128
          %s936 = scalar_lea.hbm %s4, %s935
          %s937 = sshll.u32 %s911, 4
          %s938 = int_to_ptr.vmem [resolvable:$true] %s937
          %943 = dma.vmem_to_hbm [thread:$0]  %s938, 4096, %s936, %s908, 128, 128, 8
        $region52: #{tpu_custom_call.1} parent=31 // pred_fallthru
          _
      $region32: #{tpu_custom_call.1} parent=5 // pred_fallthru
        _
      %p944 = scmp.le.s32.totalorder 2, %s21
      // Predicated region
      $region53: #{tpu_custom_call.1} parent=5 // pred_check
        %p945 = pneg %p944
      $region54: #{tpu_custom_call.1} parent=5 // pred_check_branch
        %947 = sbr.rel (%p945) target = $region56
      $region55: #{tpu_custom_call.1} parent=5 // pred_region
        %s948 = ssub.s32 %s21, 2
        // Predicated region
        $region57: #{tpu_custom_call.1} parent=55 // pred_check
          %p949 = pneg %p118
        $region58: #{tpu_custom_call.1} parent=55 // pred_check_branch
          %951 = sbr.rel (%p949) target = $region60
        $region59: #{tpu_custom_call.1} parent=55 // pred_region
          %s952 = sand.u32 %s103, 1
          %s953 = scalar_lea.sflag [#allocation4], %s952
          %s954 = sand.u32 %s103, 1
          %s955 = smul.addr %s954, 256
          %s956 = scalar_lea.vmem [#allocation8], %s955
          %957 = dma.done %s953, 4096
        $region60: #{tpu_custom_call.1} parent=55 // pred_fallthru
          _
        // Predicated region
        $region61: #{tpu_custom_call.1} parent=55 // pred_check
          %p958 = pneg %p144
        $region62: #{tpu_custom_call.1} parent=55 // pred_check_branch
          %960 = sbr.rel (%p958) target = $region64
        $region63: #{tpu_custom_call.1} parent=55 // pred_region
          %s961 = sand.u32 %s129, 1
          %s962 = scalar_lea.sflag [#allocation10], %s961
          %s963 = sand.u32 %s129, 1
          %s964 = smul.addr %s963, 256
          %s965 = scalar_lea.vmem [#allocation9], %s964
          %966 = dma.done %s962, 4096
        $region64: #{tpu_custom_call.1} parent=55 // pred_fallthru
          _
      $region56: #{tpu_custom_call.1} parent=5 // pred_fallthru
        _
    $region6: #{tpu_custom_call.1} parent=1 // loop_footer
      %s25 = sadd.s32 1, %s21
    $region7: #{tpu_custom_call.1} parent=1 // loop_footer_branch
      %20 = sbr.rel target = $region3
    $region8: #{tpu_custom_call.1} parent=1 // loop_exit
      _
    %967 = vsyncpa [#allocation3], 1
    %s968 = scalar_lea.sflag [#allocation3], 1
    %969 = vsyncpa %s968, 1
    %970 = vsyncpa [#allocation6], 1
    %971 = vsyncpa [#allocation4], 1
    %s972 = scalar_lea.sflag [#allocation4], 1
    %973 = vsyncpa %s972, 1
    %974 = vsyncpa [#allocation10], 1
    %s975 = scalar_lea.sflag [#allocation10], 1
    %976 = vsyncpa %s975, 1

</llo_original>
